<compile_context>
chip_gen: v7x
topology: tpu7x:2x2x1
jax: 0.10.0
libtpu: 0.0.40
codegen_flags: <defaults>
</compile_context>

<pallas_src>
import math

import jax
import jax.numpy as jnp
from jax.experimental import pallas as pl
from jax.experimental.pallas import tpu as pltpu


# ---------------------------------------------------------------------------
# Layout selection
# ---------------------------------------------------------------------------
def _divisors(d):
    out = []
    i = 1
    while i * i <= d:
        if d % i == 0:
            out.append(i)
            if i != d // i:
                out.append(d // i)
        i += 1
    return sorted(out)


def _choose_layout(n, d):
    """Map the (n, d) flattened problem onto a (rows, cols) 2-D slab.

    Returns (rows, cols, rows_per_sample, pad_cols, pad_rows).
    Prefers rows % 16 == 0 (bf16 targets stay sublane-dense) and rows near
    512 (tall blocks -> big DMA tiles and >=2 row blocks for v7x megacore).
    """
    best = None
    for r in _divisors(d):
        cols = d // r
        if cols % 128:              # lane axis must stay 128-aligned
            continue
        rows = n * r
        if rows % 8:                # sublane-dense rows
            continue
        score = (0 if rows % 16 == 0 else 1, abs(rows - 512))
        if best is None or score < best[1]:
            best = (r, score)
    if best is not None:
        r = best[0]
        return n * r, d // r, r, 0, 0
    # Odd shapes: one row per sample, pad with *neutral* values
    # (logit = -1e9, target = 0 contribute exactly 0 to every partial sum,
    #  and the wrapper divides BCE by the true n*d / slices off pad rows).
    cols = ((d + 127) // 128) * 128
    rows = ((n + 7) // 8) * 8
    # TODO(synk): pad cols to a larger quantum for very large odd D so the
    #             col tile is not forced down to 128 lanes.
    return rows, cols, 1, cols - d, rows - n


def _pick_row_block(rows):
    """Row-block height: whole thing if small, else >=2 blocks of <=512 rows."""
    if rows <= 128:
        return rows
    hi = min(512, rows // 2)
    hi -= hi % 8
    for tr in range(hi, 7, -8):
        if rows % tr == 0:
            return tr
    return rows


def _pick_col_tile(cols, tr, budget_elems):
    """Largest 128-multiple dividing cols with tr*td <= budget_elems."""
    cap = max(128, (budget_elems // max(tr, 1)) // 128 * 128)
    start = min(cols, cap)
    start -= start % 128
    for td in range(start, 0, -128):
        if cols % td == 0:
            return td
    return cols


def _vmem_limit_bytes():
    """Per-generation scoped VMEM limit (v7x has 64 MiB, v5e/v6e 128 MiB)."""
    cap = 64 * 1024 * 1024
    try:
        info = pltpu.get_tpu_info()
        cap = int(getattr(info, "vmem_capacity_bytes", cap)) or cap
    except Exception:
        pass
    return min((cap * 3) // 4, 96 * 1024 * 1024)


# ---------------------------------------------------------------------------
# Kernel
# ---------------------------------------------------------------------------
def _dicece_kernel(x_ref, t_ref, bce_ref, inter_ref, pt_ref):
    j = pl.program_id(1)                      # reduction axis (cols)

    @pl.when(j == 0)
    def _init():
        bce_ref[...] = jnp.zeros_like(bce_ref)
        inter_ref[...] = jnp.zeros_like(inter_ref)
        pt_ref[...] = jnp.zeros_like(pt_ref)

    td = x_ref.shape[1]
    chunk = 512 if td % 512 == 0 else (256 if td % 256 == 0 else 128)
    n_chunks = td // chunk
    folds = chunk // 128

    # Fully-unrolled chunk loop with static, 128-aligned slices: intermediates
    # stay bounded to (TR, chunk) regardless of how large the DMA block is.
    for c in range(n_chunks):
        lo = c * chunk
        x = x_ref[:, lo:lo + chunk].astype(jnp.float32)
        t = t_ref[:, lo:lo + chunk].astype(jnp.float32)

        # One shared transcendental: exp(-|x|) feeds both BCE and sigmoid.
        e = jnp.exp(-jnp.abs(x))
        denom = 1.0 + e
        r0 = pl.reciprocal(denom, approx=True)     # EUP vrcp
        recip = r0 * (2.0 - denom * r0)            # Newton step -> ~f32
        p = jnp.where(x >= 0, recip, e * recip)    # == sigmoid(x)
        # Stable BCE-with-logits; log(denom) reuses the existing 1 + e.
        bce = jnp.maximum(x, 0.0) - x * t + jnp.log(denom)

        def fold(v):
            # chunk lanes -> 128 lanes via plain vreg adds (no XLU).
            acc = v[:, 0:128]
            for f in range(1, folds):
                acc = acc + v[:, f * 128:(f + 1) * 128]
            return acc

        # TODO(synk): v7x — replace this VALU fold with an MXU matmul against
        #             a stacked-identity constant once bandwidth-bound.
        bce_ref[...] += fold(bce)
        inter_ref[...] += fold(p * t)
        pt_ref[...] += fold(p + t)


# ---------------------------------------------------------------------------
# Wrapper
# ---------------------------------------------------------------------------
def dice_ce_loss(out, targets, smooth=1e-5):
    """out, targets: (N, C, H, W) float arrays. Returns scalar f32 loss."""
    n = out.shape[0]
    d = int(math.prod(out.shape[1:]))
    rows, cols, r, pad_c, pad_r = _choose_layout(n, d)

    x2 = out.reshape(n, d)
    # Binary masks -> exact in bf16; halves the target stream's HBM bytes.
    t2 = targets.reshape(n, d).astype(jnp.bfloat16)
    if pad_c:
        x2 = jnp.pad(x2, ((0, 0), (0, pad_c)), constant_values=-1e9)
        t2 = jnp.pad(t2, ((0, 0), (0, pad_c)), constant_values=0)
    if pad_r:
        x2 = jnp.pad(x2, ((0, pad_r), (0, 0)), constant_values=-1e9)
        t2 = jnp.pad(t2, ((0, pad_r), (0, 0)), constant_values=0)
    x2 = x2.reshape(rows, cols)
    t2 = t2.reshape(rows, cols)

    tr = _pick_row_block(rows)
    vmem_limit = _vmem_limit_bytes()
    # ~12 bytes/elem: double-buffered f32 logits + bf16 targets; keep the
    # input buffers under ~half the limit, the rest for accumulators/temps.
    budget_elems = max(8 * 128, vmem_limit // 24)
    td = _pick_col_tile(cols, tr, budget_elems)
    grid = (rows // tr, cols // td)

    cost = pl.CostEstimate(
        flops=int(15 * rows * cols),
        transcendentals=int(3 * rows * cols),
        bytes_accessed=int(rows * cols * (4 + 2) + 3 * rows * 128 * 4),
    )

    bce_rows, inter_rows, pt_rows = pl.pallas_call(
        _dicece_kernel,
        out_shape=(
            jax.ShapeDtypeStruct((rows, 128), jnp.float32),
            jax.ShapeDtypeStruct((rows, 128), jnp.float32),
            jax.ShapeDtypeStruct((rows, 128), jnp.float32),
        ),
        grid_spec=pltpu.PrefetchScalarGridSpec(
            num_scalar_prefetch=0,
            grid=grid,                              # (row blocks, col tiles)
            in_specs=[
                pl.BlockSpec((tr, td), lambda i, j: (i, j)),
                pl.BlockSpec((tr, td), lambda i, j: (i, j)),
            ],
            out_specs=[
                pl.BlockSpec((tr, 128), lambda i, j: (i, 0)),
                pl.BlockSpec((tr, 128), lambda i, j: (i, 0)),
                pl.BlockSpec((tr, 128), lambda i, j: (i, 0)),
            ],
        ),
        compiler_params=pltpu.CompilerParams(
            dimension_semantics=("parallel", "arbitrary"),
            vmem_limit_bytes=int(vmem_limit),
        ),
        cost_estimate=cost,
    )(x2, t2)

    # Tiny epilogue in XLA: per-sample dice ratios and the scalar combine.
    bce_mean = jnp.sum(bce_rows) / jnp.float32(n * d)
    valid = n * r                                   # drop padded rows (if any)
    inter = jnp.sum(inter_rows[:valid].reshape(n, -1), axis=1)
    pt = jnp.sum(pt_rows[:valid].reshape(n, -1), axis=1)
    dice = (2.0 * inter + smooth) / (pt + smooth)
    return 0.5 * bce_mean - jnp.sum(dice) / n


# ---------------------------------------------------------------------------
# Pure-JAX reference mirroring the PyTorch module
# ---------------------------------------------------------------------------
def _reference(out, targets, smooth=1e-5):
    n = out.shape[0]
    x = out.reshape(n, -1).astype(jnp.float32)
    t = targets.reshape(n, -1).astype(jnp.float32)
    bce = jnp.mean(jnp.maximum(x, 0.0) - x * t + jnp.log1p(jnp.exp(-jnp.abs(x))))
    p = jax.nn.sigmoid(x)
    dice = (2.0 * jnp.sum(p * t, axis=1) + smooth) / (
        jnp.sum(p, axis=1) + jnp.sum(t, axis=1) + smooth)
    return 0.5 * bce - jnp.sum(dice) / n


if __name__ == "__main__":
    key = jax.random.PRNGKey(0)
    cases = [
        ((2, 4, 16, 16), 1e-5),    # rows=16, cols=128, grid=(1, 1)
        ((2, 16, 32, 32), 1e-3),   # rows=256 -> 2 row blocks, runtime smooth
    ]
    for shape, smooth in cases:
        key, k1, k2 = jax.random.split(key, 3)
        logits = jax.random.normal(k1, shape, dtype=jnp.float32)
        targets = (jax.random.uniform(k2, shape) > 0.5).astype(jnp.float32)

        loss = jax.block_until_ready(dice_ce_loss(logits, targets, smooth=smooth))
        ref = jax.block_until_ready(_reference(logits, targets, smooth=smooth))
        assert jnp.allclose(loss, ref, rtol=2e-4, atol=2e-4), (shape, loss, ref)

    print("KERNEL_OK")
</pallas_src>

<mosaic_0001>
module attributes {stable_mosaic.version = 11 : i64} {
  func.func @_dicece_kernel(%arg0: i32, %arg1: i32, %arg2: memref<16x128xf32, #tpu.memory_space<vmem>>, %arg3: memref<16x128xbf16, #tpu.memory_space<vmem>>, %arg4: memref<16x128xf32, #tpu.memory_space<vmem>>, %arg5: memref<16x128xf32, #tpu.memory_space<vmem>>, %arg6: memref<16x128xf32, #tpu.memory_space<vmem>>) attributes {dimension_semantics = [#tpu.dimension_semantics<parallel>, #tpu.dimension_semantics<arbitrary>], iteration_bounds = array<i64: 1, 1>, scalar_prefetch = 0 : i64, scratch_operands = 0 : i64, tpu.core_type = #tpu.core_type<tc>, window_params = [{transform_indices = @transform_0, window_bounds = array<i64: 16, 128>}, {transform_indices = @transform_1, window_bounds = array<i64: 16, 128>}, {transform_indices = @transform_2, window_bounds = array<i64: 16, 128>}, {transform_indices = @transform_3, window_bounds = array<i64: 16, 128>}, {transform_indices = @transform_4, window_bounds = array<i64: 16, 128>}]} {
    %c0_i32 = arith.constant 0 : i32
    %0 = arith.cmpi eq, %arg1, %c0_i32 : i32
    %1 = arith.extui %0 : i1 to i32
    %c0_i32_0 = arith.constant 0 : i32
    %2 = arith.cmpi ne, %1, %c0_i32_0 : i32
    scf.if %2 {
      %cst_20 = arith.constant 0.000000e+00 : f32
      %38 = vector.broadcast %cst_20 : f32 to vector<16x128xf32>
      %c0_21 = arith.constant 0 : index
      %c0_22 = arith.constant 0 : index
      %39 = vector.load %arg4[%c0_21, %c0_22] : memref<16x128xf32, #tpu.memory_space<vmem>>, vector<16x128xf32>
      tpu.vector_store %arg4[%c0_21, %c0_22], %38 {strides = array<i32>} : memref<16x128xf32, #tpu.memory_space<vmem>>, vector<16x128xf32>,
      %cst_23 = arith.constant 0.000000e+00 : f32
      %40 = vector.broadcast %cst_23 : f32 to vector<16x128xf32>
      %c0_24 = arith.constant 0 : index
      %c0_25 = arith.constant 0 : index
      %41 = vector.load %arg5[%c0_24, %c0_25] : memref<16x128xf32, #tpu.memory_space<vmem>>, vector<16x128xf32>
      tpu.vector_store %arg5[%c0_24, %c0_25], %40 {strides = array<i32>} : memref<16x128xf32, #tpu.memory_space<vmem>>, vector<16x128xf32>,
      %cst_26 = arith.constant 0.000000e+00 : f32
      %42 = vector.broadcast %cst_26 : f32 to vector<16x128xf32>
      %c0_27 = arith.constant 0 : index
      %c0_28 = arith.constant 0 : index
      %43 = vector.load %arg6[%c0_27, %c0_28] : memref<16x128xf32, #tpu.memory_space<vmem>>, vector<16x128xf32>
      tpu.vector_store %arg6[%c0_27, %c0_28], %42 {strides = array<i32>} : memref<16x128xf32, #tpu.memory_space<vmem>>, vector<16x128xf32>,
    } else {
    }
    %c0 = arith.constant 0 : index
    %c0_1 = arith.constant 0 : index
    %3 = vector.load %arg2[%c0, %c0_1] : memref<16x128xf32, #tpu.memory_space<vmem>>, vector<16x128xf32>
    %c0_2 = arith.constant 0 : index
    %c0_3 = arith.constant 0 : index
    %4 = vector.load %arg3[%c0_2, %c0_3] : memref<16x128xbf16, #tpu.memory_space<vmem>>, vector<16x128xbf16>
    %5 = arith.extf %4 : vector<16x128xbf16> to vector<16x128xf32>
    %6 = math.absf %3 : vector<16x128xf32>
    %cst = arith.constant 0.000000e+00 : f32
    %7 = vector.broadcast %cst : f32 to vector<16x128xf32>
    %8 = arith.subf %7, %6 : vector<16x128xf32>
    %9 = math.exp %8 : vector<16x128xf32>
    %cst_4 = arith.constant 1.000000e+00 : f32
    %10 = vector.broadcast %cst_4 : f32 to vector<16x128xf32>
    %11 = arith.addf %10, %9 : vector<16x128xf32>
    %12 = tpu.reciprocal %11 {approx = true} : vector<16x128xf32> -> vector<16x128xf32>
    %13 = arith.mulf %11, %12 : vector<16x128xf32>
    %cst_5 = arith.constant 2.000000e+00 : f32
    %14 = vector.broadcast %cst_5 : f32 to vector<16x128xf32>
    %15 = arith.subf %14, %13 : vector<16x128xf32>
    %16 = arith.mulf %12, %15 : vector<16x128xf32>
    %cst_6 = arith.constant 0.000000e+00 : f32
    %17 = vector.broadcast %cst_6 : f32 to vector<16x128xf32>
    %18 = arith.cmpf oge, %3, %17 : vector<16x128xf32>
    %19 = arith.mulf %9, %16 : vector<16x128xf32>
    %20 = arith.select %18, %16, %19 : vector<16x128xi1>, vector<16x128xf32>
    %cst_7 = arith.constant 0.000000e+00 : f32
    %21 = vector.broadcast %cst_7 : f32 to vector<16x128xf32>
    %22 = arith.maximumf %3, %21 : vector<16x128xf32>
    %23 = arith.mulf %3, %5 : vector<16x128xf32>
    %24 = arith.subf %22, %23 : vector<16x128xf32>
    %25 = math.log %11 : vector<16x128xf32>
    %26 = arith.addf %24, %25 : vector<16x128xf32>
    %c0_8 = arith.constant 0 : index
    %c0_9 = arith.constant 0 : index
    %27 = vector.load %arg4[%c0_8, %c0_9] : memref<16x128xf32, #tpu.memory_space<vmem>>, vector<16x128xf32>
    %28 = arith.addf %27, %26 : vector<16x128xf32>
    %c0_10 = arith.constant 0 : index
    %c0_11 = arith.constant 0 : index
    %29 = vector.load %arg4[%c0_10, %c0_11] : memref<16x128xf32, #tpu.memory_space<vmem>>, vector<16x128xf32>
    tpu.vector_store %arg4[%c0_10, %c0_11], %28 {strides = array<i32>} : memref<16x128xf32, #tpu.memory_space<vmem>>, vector<16x128xf32>,
    %c0_12 = arith.constant 0 : index
    %c0_13 = arith.constant 0 : index
    %30 = vector.load %arg5[%c0_12, %c0_13] : memref<16x128xf32, #tpu.memory_space<vmem>>, vector<16x128xf32>
    %31 = arith.mulf %20, %5 : vector<16x128xf32>
    %32 = arith.addf %30, %31 : vector<16x128xf32>
    %c0_14 = arith.constant 0 : index
    %c0_15 = arith.constant 0 : index
    %33 = vector.load %arg5[%c0_14, %c0_15] : memref<16x128xf32, #tpu.memory_space<vmem>>, vector<16x128xf32>
    tpu.vector_store %arg5[%c0_14, %c0_15], %32 {strides = array<i32>} : memref<16x128xf32, #tpu.memory_space<vmem>>, vector<16x128xf32>,
    %c0_16 = arith.constant 0 : index
    %c0_17 = arith.constant 0 : index
    %34 = vector.load %arg6[%c0_16, %c0_17] : memref<16x128xf32, #tpu.memory_space<vmem>>, vector<16x128xf32>
    %35 = arith.addf %20, %5 : vector<16x128xf32>
    %36 = arith.addf %34, %35 : vector<16x128xf32>
    %c0_18 = arith.constant 0 : index
    %c0_19 = arith.constant 0 : index
    %37 = vector.load %arg6[%c0_18, %c0_19] : memref<16x128xf32, #tpu.memory_space<vmem>>, vector<16x128xf32>
    tpu.vector_store %arg6[%c0_18, %c0_19], %36 {strides = array<i32>} : memref<16x128xf32, #tpu.memory_space<vmem>>, vector<16x128xf32>,
    return
  }
  func.func @transform_0(%arg0: i32, %arg1: i32) -> (i32, i32) {
    %c0_i32 = arith.constant 0 : i32
    return %arg0, %arg1 : i32, i32
  }
  func.func @transform_1(%arg0: i32, %arg1: i32) -> (i32, i32) {
    %c0_i32 = arith.constant 0 : i32
    return %arg0, %arg1 : i32, i32
  }
  func.func @transform_2(%arg0: i32, %arg1: i32) -> (i32, i32) {
    %c0_i32 = arith.constant 0 : i32
    %c0_i32_0 = arith.constant 0 : i32
    return %arg0, %c0_i32 : i32, i32
  }
  func.func @transform_3(%arg0: i32, %arg1: i32) -> (i32, i32) {
    %c0_i32 = arith.constant 0 : i32
    %c0_i32_0 = arith.constant 0 : i32
    return %arg0, %c0_i32 : i32, i32
  }
  func.func @transform_4(%arg0: i32, %arg1: i32) -> (i32, i32) {
    %c0_i32 = arith.constant 0 : i32
    %c0_i32_0 = arith.constant 0 : i32
    return %arg0, %c0_i32 : i32, i32
  }
}

</mosaic_0001>

<llo_original>
// kernel: tpu_custom_call.1
$region0: #{tpu_custom_call.1}
  #allocation0 [shape = 'u32[]', space=smem, size = 0x4, offset = 0x4, fixed_abs, tag = 'smem constant byte address 0x4 - core index']
  #allocation1 [shape = 'u32[144,128]{1,0:T(1,128)}', space=vmem, size = 0x12000, scoped, tag = 'internal scratch']
  %s0 = inlined_call_operand.hbm [shape: f32[16,128], index: 0, kind: input, shape index: {}]
  %s1 = inlined_call_operand.hbm [shape: bf16[16,128], index: 1, kind: input, shape index: {}]
  %s2 = inlined_call_operand.hbm [shape: f32[16,128], index: 2, kind: output, shape index: {0}]
  %s3 = inlined_call_operand.hbm [shape: f32[16,128], index: 3, kind: output, shape index: {1}]
  %s4 = inlined_call_operand.hbm [shape: f32[16,128], index: 4, kind: output, shape index: {2}]
  %5 = xla_tuple %s2, %s3, %s4
  %s6 = sld [smem:[#allocation0]]
  $region46: #{tpu_custom_call.1} parent=0
    _
  %s8 = ssub.s32 1, %s6
  %s9 = scalar_select 0, %s8, %s6
  $region1: #{tpu_custom_call.1} parent=0
    #allocation2 [shape = 'u8[8192]{0}', space=vmem, size = 0x2000, scoped, tag = 'input window, operand 0, single buffered']
    #allocation3 [shape = 's32[1]{0}', space=sflag, size = 0x4, scoped, tag = 'scoped memory for tpu_custom_call.1']
    #allocation4 [shape = 's32[1]{0}', space=sflag, size = 0x4, scoped, tag = 'scoped memory for tpu_custom_call.1']
    #allocation5 [shape = 'u8[4096]{0}', space=vmem, size = 0x1000, scoped, tag = 'input window, operand 1, single buffered']
    #allocation6 [shape = 's32[1]{0}', space=sflag, size = 0x4, scoped, tag = 'scoped memory for tpu_custom_call.1']
    #allocation7 [shape = 'u8[8192]{0}', space=vmem, size = 0x2000, scoped, tag = 'output window, operand 0, single buffered']
    #allocation8 [shape = 'u8[8192]{0}', space=vmem, size = 0x2000, scoped, tag = 'output window, operand 1, single buffered']
    #allocation9 [shape = 's32[1]{0}', space=sflag, size = 0x4, scoped, tag = 'scoped memory for tpu_custom_call.1']
    #allocation10 [shape = 'u8[8192]{0}', space=vmem, size = 0x2000, scoped, tag = 'output window, operand 2, single buffered']
    %10 = vsyncpa [#allocation3], 0
    %11 = vsyncpa [#allocation6], 0
    %12 = vsyncpa [#allocation4], 0
    %13 = vsyncpa [#allocation9], 0
    // Predicated region
    $region2: #{tpu_custom_call.1} parent=1 // pred_check
      _
    $region3: #{tpu_custom_call.1} parent=1 // pred_check_branch
      %15 = sbr.rel (0) target = $region5
    $region4: #{tpu_custom_call.1} parent=1 // pred_region
      %s17 = ssub.s32 256, 256
      %18 = vsyncadd [#allocation3], %s17
      %s19 = sshll.u32 [#allocation2], 4
      %s20 = int_to_ptr.vmem [resolvable:$true] %s19
      %25 = dma.hbm_to_vmem [thread:$0]  %s0, 256, %s20, [#allocation3], 128, 128, 8
    $region5: #{tpu_custom_call.1} parent=1 // pred_fallthru
      _
    // Predicated region
    $region6: #{tpu_custom_call.1} parent=1 // pred_check
      _
    $region7: #{tpu_custom_call.1} parent=1 // pred_check_branch
      %27 = sbr.rel (0) target = $region9
    $region8: #{tpu_custom_call.1} parent=1 // pred_region
      %s29 = ssub.s32 128, 128
      %30 = vsyncadd [#allocation6], %s29
      %s31 = sshll.u32 [#allocation5], 4
      %s32 = int_to_ptr.vmem [resolvable:$true] %s31
      %37 = dma.hbm_to_vmem [thread:$0]  %s1, 128, %s32, [#allocation6], 64, 64, 4
    $region9: #{tpu_custom_call.1} parent=1 // pred_fallthru
      _
    // Predicated region
    $region10: #{tpu_custom_call.1} parent=1 // pred_check
      _
    $region11: #{tpu_custom_call.1} parent=1 // pred_check_branch
      %39 = sbr.rel (0) target = $region13
    $region12: #{tpu_custom_call.1} parent=1 // pred_region
      %40 = dma.done [#allocation3], 256
    $region13: #{tpu_custom_call.1} parent=1 // pred_fallthru
      _
    // Predicated region
    $region14: #{tpu_custom_call.1} parent=1 // pred_check
      _
    $region15: #{tpu_custom_call.1} parent=1 // pred_check_branch
      %42 = sbr.rel (0) target = $region17
    $region16: #{tpu_custom_call.1} parent=1 // pred_region
      %43 = dma.done [#allocation6], 128
    $region17: #{tpu_custom_call.1} parent=1 // pred_fallthru
      _
    %p44 = scmp.eq.s32.totalorder 0, 0
    // Predicated region
    $region18: #{tpu_custom_call.1} parent=1 // pred_check
      %p45 = pneg %p44
    $region19: #{tpu_custom_call.1} parent=1 // pred_check_branch
      %47 = sbr.rel (%p45) target = $region21
    $region20: #{tpu_custom_call.1} parent=1 // pred_region
      %48 = vst [vmem:[#allocation7] sm:$0xff] 0.0
      %49 = vst [vmem:[#allocation7 + $0x8] sm:$0xff] 0.0
      %50 = vst [vmem:[#allocation8] sm:$0xff] 0.0
      %51 = vst [vmem:[#allocation8 + $0x8] sm:$0xff] 0.0
      %52 = vst [vmem:[#allocation10] sm:$0xff] 0.0
      %53 = vst [vmem:[#allocation10 + $0x8] sm:$0xff] 0.0
    $region21: #{tpu_custom_call.1} parent=1 // pred_fallthru
      _
    %v54 = vld [vmem:[#allocation2] sm:$0xff]
    %v55 = vld [vmem:[#allocation2 + $0x8] sm:$0xff]
    %v56 = vld [vmem:[#allocation5] sm:$0xf]
    %v57 = vld [vmem:[#allocation5 + $0x4] sm:$0xf]
    %v58 = vunpack.c.l.bf16 %v56
    %v59 = vunpack.c.l.bf16 %v57
    %v60 = vand.u32 2147483647, %v54
    %v61 = vand.u32 2147483647, %v55
    %v62 = vsub.f32 0.0, %v60
    %v63 = vsub.f32 0.0, %v61
    %v64 = vmul.f32 %v62, 1.442695
    %v65 = vpow.pop %v64
    %v66 = vmul.f32 %v63, 1.442695
    %v67 = vpow.pop %v66
    %v68 = vadd.f32 %v65, 1.0
    %v69 = vadd.f32 %v67, 1.0
    %v70 = vrcp.pop %v68
    %v71 = vrcp.pop %v69
    %v72 = vmul.f32 %v68, %v70
    %v73 = vmul.f32 %v69, %v71
    %v74 = vsub.f32 2.0, %v72
    %v75 = vsub.f32 2.0, %v73
    %v76 = vmul.f32 %v70, %v74
    %v77 = vmul.f32 %v71, %v75
    %vm78 = vcmp.ge.f32.partialorder %v54, 0.0
    %vm79 = vcmp.ge.f32.partialorder %v55, 0.0
    %v80 = vmul.f32 %v65, %v76
    %v81 = vmul.f32 %v67, %v77
    %v82 = vsel %vm78, %v76, %v80
    %v83 = vsel %vm79, %v77, %v81
    %v84 = vmax.f32 %v54, 0.0
    %v85 = vmax.f32 %v55, 0.0
    %v86 = vmul.f32 %v54, %v58
    %v87 = vmul.f32 %v55, %v59
    %v88 = vsub.f32 %v84, %v86
    %v89 = vsub.f32 %v85, %v87
    %v90 = vlog2.pop %v68
    %v91 = vmul.f32 %v90, 0.6931472
    %v92 = vlog2.pop %v69
    %v93 = vmul.f32 %v92, 0.6931472
    %v94 = vadd.f32 %v88, %v91
    %v95 = vadd.f32 %v89, %v93
    %v96 = vld [vmem:[#allocation7] sm:$0xff]
    %v97 = vld [vmem:[#allocation7 + $0x8] sm:$0xff]
    %v98 = vadd.f32 %v96, %v94
    %v99 = vadd.f32 %v97, %v95
    %100 = vst [vmem:[#allocation7] sm:$0xff] %v98
    %101 = vst [vmem:[#allocation7 + $0x8] sm:$0xff] %v99
    %v102 = vld [vmem:[#allocation8] sm:$0xff]
    %v103 = vld [vmem:[#allocation8 + $0x8] sm:$0xff]
    %v104 = vmul.f32 %v82, %v58
    %v105 = vmul.f32 %v83, %v59
    %v106 = vadd.f32 %v102, %v104
    %v107 = vadd.f32 %v103, %v105
    %108 = vst [vmem:[#allocation8] sm:$0xff] %v106
    %109 = vst [vmem:[#allocation8 + $0x8] sm:$0xff] %v107
    %v110 = vld [vmem:[#allocation10] sm:$0xff]
    %v111 = vld [vmem:[#allocation10 + $0x8] sm:$0xff]
    %v112 = vadd.f32 %v82, %v58
    %v113 = vadd.f32 %v83, %v59
    %v114 = vadd.f32 %v110, %v112
    %v115 = vadd.f32 %v111, %v113
    %116 = vst [vmem:[#allocation10] sm:$0xff] %v114
    %117 = vst [vmem:[#allocation10 + $0x8] sm:$0xff] %v115
    // Predicated region
    $region22: #{tpu_custom_call.1} parent=1 // pred_check
      _
    $region23: #{tpu_custom_call.1} parent=1 // pred_check_branch
      %119 = sbr.rel (0) target = $region25
    $region24: #{tpu_custom_call.1} parent=1 // pred_region
      %s121 = ssub.s32 256, 256
      %122 = vsyncadd [#allocation4], %s121
      %s123 = sshll.u32 [#allocation7], 4
      %s124 = int_to_ptr.vmem [resolvable:$true] %s123
      %129 = dma.vmem_to_hbm [thread:$0]  %s124, 256, %s2, [#allocation4], 128, 128, 8
    $region25: #{tpu_custom_call.1} parent=1 // pred_fallthru
      _
    // Predicated region
    $region26: #{tpu_custom_call.1} parent=1 // pred_check
      _
    $region27: #{tpu_custom_call.1} parent=1 // pred_check_branch
      %131 = sbr.rel (0) target = $region29
    $region28: #{tpu_custom_call.1} parent=1 // pred_region
      %s133 = ssub.s32 256, 256
      %134 = vsyncadd [#allocation9], %s133
      %s135 = sshll.u32 [#allocation8], 4
      %s136 = int_to_ptr.vmem [resolvable:$true] %s135
      %141 = dma.vmem_to_hbm [thread:$0]  %s136, 256, %s3, [#allocation9], 128, 128, 8
    $region29: #{tpu_custom_call.1} parent=1 // pred_fallthru
      _
    // Predicated region
    $region30: #{tpu_custom_call.1} parent=1 // pred_check
      _
    $region31: #{tpu_custom_call.1} parent=1 // pred_check_branch
      %143 = sbr.rel (0) target = $region33
    $region32: #{tpu_custom_call.1} parent=1 // pred_region
      %s145 = ssub.s32 256, 256
      %146 = vsyncadd [#allocation9], %s145
      %s147 = sshll.u32 [#allocation10], 4
      %s148 = int_to_ptr.vmem [resolvable:$true] %s147
      %153 = dma.vmem_to_hbm [thread:$0]  %s148, 256, %s4, [#allocation9], 128, 128, 8
    $region33: #{tpu_custom_call.1} parent=1 // pred_fallthru
      _
    // Predicated region
    $region34: #{tpu_custom_call.1} parent=1 // pred_check
      _
    $region35: #{tpu_custom_call.1} parent=1 // pred_check_branch
      %155 = sbr.rel (0) target = $region37
    $region36: #{tpu_custom_call.1} parent=1 // pred_region
      %156 = dma.done [#allocation4], 256
    $region37: #{tpu_custom_call.1} parent=1 // pred_fallthru
      _
    // Predicated region
    $region38: #{tpu_custom_call.1} parent=1 // pred_check
      _
    $region39: #{tpu_custom_call.1} parent=1 // pred_check_branch
      %158 = sbr.rel (0) target = $region41
    $region40: #{tpu_custom_call.1} parent=1 // pred_region
      %159 = dma.done [#allocation9], 256
    $region41: #{tpu_custom_call.1} parent=1 // pred_fallthru
      _
    // Predicated region
    $region42: #{tpu_custom_call.1} parent=1 // pred_check
      _
    $region43: #{tpu_custom_call.1} parent=1 // pred_check_branch
      %161 = sbr.rel (0) target = $region45
    $region44: #{tpu_custom_call.1} parent=1 // pred_region
      %162 = dma.done [#allocation9], 256
    $region45: #{tpu_custom_call.1} parent=1 // pred_fallthru
      _
    %163 = vsyncpa [#allocation3], 1
    %164 = vsyncpa [#allocation6], 1
    %165 = vsyncpa [#allocation4], 1
    %166 = vsyncpa [#allocation9], 1

</llo_original>
